<compile_context>
chip_gen: v7x
topology: tpu7x:2x2x1
jax: 0.10.0
libtpu: 0.0.40
codegen_flags: <defaults>
</compile_context>

<pallas_src>
import jax
import jax.numpy as jnp
from jax import lax
from jax.experimental import pallas as pl
from jax.experimental.pallas import tpu as pltpu


def _modrelu_kernel(x_ref, b_ref, o_ref):
    # x_ref: (bm, bl) with (re, im) interleaved along the last (lane) dim.
    # b_ref: (bm, 1) per-row bias (row = flattened (n, c) index -> b[c]).
    x = x_ref[...]
    b = b_ref[...]
    bl = x.shape[-1]

    x2 = x * x
    # Partner-lane squares.  pltpu.roll follows np.roll semantics:
    #   roll(v, s)[j] = v[(j - s) % bl]
    # shift=1        -> prv[j] = x2[j - 1]
    # shift=bl-1 (-1)-> nxt[j] = x2[j + 1]
    # With bl tiled small both rotates only touch adjacent vregs (same cost
    # as a +-1 rotate); wrap-around lanes are masked out by the parity select.
    prv = pltpu.roll(x2, shift=1, axis=1)
    nxt = pltpu.roll(x2, shift=bl - 1, axis=1)
    lane = lax.broadcasted_iota(jnp.int32, x.shape, dimension=1)
    is_re = (lane & 1) == 0
    sq = x2 + jnp.where(is_re, nxt, prv)      # |z|^2, same value on both lanes of a pair

    safe = sq > 0.0
    r = lax.rsqrt(jnp.where(safe, sq, 1.0))   # 1/|z| (EUP); finite even for subnormal sq
    mag = jnp.where(safe, sq, 0.0) * r        # |z| = sq * rsqrt(sq)
    new_mag = jnp.maximum(mag + b, 0.0)       # relu(|z| + b[c])
    scale = new_mag * r                       # relu(|z| + b[c]) / |z|

    # |z| == 0: phase = atan2(0, 0) = 0 -> (new_mag, 0).
    o_ref[...] = jnp.where(safe, x * scale, jnp.where(is_re, new_mag, 0.0))


def _aligned_divisors(dim, align):
    """Divisors of `dim` that are multiples of `align`, plus `dim` itself,
    in descending order.  If `dim` is not a multiple of `align`, only [dim]
    (full-extent blocks are always legal)."""
    divs = {dim}
    if dim % align == 0:
        d = align
        while d < dim:
            if dim % d == 0:
                divs.add(d)
            d += align
    return sorted(divs, reverse=True)


def _choose_blocks(R, L, itemsize, target_bytes=2 << 20, min_steps=8):
    """Pick (block_m, block_l): (8,128)-aligned divisors targeting
    ~`target_bytes` per block and >= `min_steps` total grid steps."""
    row_divs = _aligned_divisors(R, 8)       # descending, always contains R
    lane_divs = _aligned_divisors(L, 128)    # descending, always contains L

    # Largest lane block such that even a minimum-height block fits the target.
    min_rows = min(R, 8)
    block_l = next(
        (d for d in lane_divs if d * min_rows * itemsize <= target_bytes),
        lane_divs[-1])
    # Largest row block keeping the full block within the byte target.
    block_m = next(
        (d for d in row_divs if d * block_l * itemsize <= target_bytes),
        row_divs[-1])

    def nsteps(bm, bl):
        return pl.cdiv(R, bm) * pl.cdiv(L, bl)

    # Shrink (rows first — keeps output blocks lane-dense/full-row — then
    # lanes) until >= min_steps grid steps, never below the (8,128) floor.
    ri = row_divs.index(block_m)
    li = lane_divs.index(block_l)
    while nsteps(block_m, block_l) < min_steps:
        if ri + 1 < len(row_divs):
            ri += 1
            block_m = row_divs[ri]
        elif li + 1 < len(lane_divs):
            li += 1
            block_l = lane_divs[li]
        else:
            break

    # Mild preference for an even total step count (balanced v7x megacore split).
    if nsteps(block_m, block_l) % 2 == 1 and ri + 1 < len(row_divs):
        cand = row_divs[ri + 1]
        if nsteps(cand, block_l) % 2 == 0:
            block_m = cand

    return block_m, block_l


def modrelu(x, b):
    """ModReLU forward.

    x: (N, C, H, W, 2) float32, last axis = (real, imag)
    b: (C,) float32 per-channel bias (applied along axis 1)
    returns (N, C, H, W, 2) float32
    """
    N, C, H, W, two = x.shape
    assert two == 2
    assert b.shape == (C,)

    R = N * C            # one (n, c) image plane per row
    L = H * W * 2        # interleaved complex plane -> lane-dense last dim

    x2d = x.reshape(R, L)                    # free contiguous reshape
    b_rows = jnp.tile(b, N).reshape(R, 1)    # per-row bias table (tiny): b[r % C]

    block_m, block_l = _choose_blocks(R, L, itemsize=x.dtype.itemsize)
    grid = (pl.cdiv(R, block_m), pl.cdiv(L, block_l))

    out2d = pl.pallas_call(
        _modrelu_kernel,
        out_shape=jax.ShapeDtypeStruct((R, L), x.dtype),
        grid_spec=pltpu.PrefetchScalarGridSpec(
            num_scalar_prefetch=0,
            grid=grid,
            in_specs=[
                pl.BlockSpec((block_m, block_l), lambda i, j: (i, j)),  # interleaved x
                pl.BlockSpec((block_m, 1), lambda i, j: (i, 0)),        # per-row bias
            ],
            out_specs=pl.BlockSpec((block_m, block_l), lambda i, j: (i, j)),
        ),
        compiler_params=pltpu.CompilerParams(
            dimension_semantics=("parallel", "parallel"),
            # ~2 MiB blocks, double-buffered in + out ~= 8 MiB; 24 MiB budget
            # is safe on v5e/v6e (128 MiB physical) and v7x (64 MiB physical).
            vmem_limit_bytes=24 * 1024 * 1024,
        ),
    )(x2d, b_rows)

    return out2d.reshape(N, C, H, W, 2)


def modrelu_reference(x, b):
    real = x[..., 0]
    imag = x[..., 1]
    mag = jnp.sqrt(real * real + imag * imag)
    phase = jnp.arctan2(imag, real)
    new_mag = jax.nn.relu(mag + b[None, :, None, None])
    return jnp.stack([new_mag * jnp.cos(phase), new_mag * jnp.sin(phase)], axis=-1)


if __name__ == "__main__":
    # Small shapes; W == C so the torch broadcast_to/swapaxes trick is valid.
    N, C, H, W = 2, 8, 16, 8

    key = jax.random.PRNGKey(0)
    kx, kb = jax.random.split(key)
    x = jax.random.normal(kx, (N, C, H, W, 2), dtype=jnp.float32)
    # Deterministic init matching b.data.uniform_(-0.1, 0.1)
    b = jax.random.uniform(kb, (C,), dtype=jnp.float32, minval=-0.1, maxval=0.1)

    out = jax.block_until_ready(modrelu(x, b))

    ref = modrelu_reference(x, b)
    assert out.shape == (N, C, H, W, 2)
    assert jnp.allclose(out, ref, atol=1e-5, rtol=1e-4)

    print("KERNEL_OK")
</pallas_src>

<mosaic_0001>
module attributes {stable_mosaic.version = 11 : i64} {
  func.func @_modrelu_kernel(%arg0: i32, %arg1: i32, %arg2: memref<8x128xf32, #tpu.memory_space<vmem>>, %arg3: memref<8x1xf32, #tpu.memory_space<vmem>>, %arg4: memref<8x128xf32, #tpu.memory_space<vmem>>) attributes {dimension_semantics = [#tpu.dimension_semantics<parallel>, #tpu.dimension_semantics<parallel>], iteration_bounds = array<i64: 2, 2>, scalar_prefetch = 0 : i64, scratch_operands = 0 : i64, tpu.core_type = #tpu.core_type<tc>, window_params = [{transform_indices = @transform_0, window_bounds = array<i64: 8, 128>}, {transform_indices = @transform_1, window_bounds = array<i64: 8, 1>}, {transform_indices = @transform_2, window_bounds = array<i64: 8, 128>}]} {
    %c0 = arith.constant 0 : index
    %c0_0 = arith.constant 0 : index
    %0 = vector.load %arg2[%c0, %c0_0] : memref<8x128xf32, #tpu.memory_space<vmem>>, vector<8x128xf32>
    %c0_1 = arith.constant 0 : index
    %c0_2 = arith.constant 0 : index
    %1 = vector.load %arg3[%c0_1, %c0_2] : memref<8x1xf32, #tpu.memory_space<vmem>>, vector<8x1xf32>
    %2 = arith.mulf %0, %0 : vector<8x128xf32>
    %c1_i32 = arith.constant 1 : i32
    %3 = tpu.dynamic_rotate %2 by %c1_i32 dim 1 : vector<8x128xf32>, i32 -> vector<8x128xf32>
    %c127_i32 = arith.constant 127 : i32
    %4 = tpu.dynamic_rotate %2 by %c127_i32 dim 1 : vector<8x128xf32>, i32 -> vector<8x128xf32>
    %5 = tpu.iota {dimensions = array<i32: 1>} : vector<8x128xi32>
    %c1_i32_3 = arith.constant 1 : i32
    %6 = vector.broadcast %c1_i32_3 : i32 to vector<8x128xi32>
    %7 = arith.andi %5, %6 : vector<8x128xi32>
    %c0_i32 = arith.constant 0 : i32
    %8 = vector.broadcast %c0_i32 : i32 to vector<8x128xi32>
    %9 = arith.cmpi eq, %7, %8 : vector<8x128xi32>
    %10 = arith.select %9, %4, %3 : vector<8x128xi1>, vector<8x128xf32>
    %11 = arith.addf %2, %10 : vector<8x128xf32>
    %cst = arith.constant 0.000000e+00 : f32
    %12 = vector.broadcast %cst : f32 to vector<8x128xf32>
    %13 = arith.cmpf ogt, %11, %12 : vector<8x128xf32>
    %cst_4 = arith.constant 1.000000e+00 : f32
    %14 = vector.broadcast %cst_4 : f32 to vector<8x128xf32>
    %15 = arith.select %13, %11, %14 : vector<8x128xi1>, vector<8x128xf32>
    %16 = math.rsqrt %15 : vector<8x128xf32>
    %cst_5 = arith.constant 0.000000e+00 : f32
    %17 = vector.broadcast %cst_5 : f32 to vector<8x128xf32>
    %18 = arith.select %13, %11, %17 : vector<8x128xi1>, vector<8x128xf32>
    %19 = arith.mulf %18, %16 : vector<8x128xf32>
    %20 = vector.broadcast %1 : vector<8x1xf32> to vector<8x128xf32>
    %21 = arith.addf %19, %20 : vector<8x128xf32>
    %cst_6 = arith.constant 0.000000e+00 : f32
    %22 = vector.broadcast %cst_6 : f32 to vector<8x128xf32>
    %23 = arith.maximumf %21, %22 : vector<8x128xf32>
    %24 = arith.mulf %23, %16 : vector<8x128xf32>
    %25 = arith.mulf %0, %24 : vector<8x128xf32>
    %cst_7 = arith.constant 0.000000e+00 : f32
    %26 = vector.broadcast %cst_7 : f32 to vector<8x128xf32>
    %27 = arith.select %9, %23, %26 : vector<8x128xi1>, vector<8x128xf32>
    %28 = arith.select %13, %25, %27 : vector<8x128xi1>, vector<8x128xf32>
    %c0_8 = arith.constant 0 : index
    %c0_9 = arith.constant 0 : index
    %29 = vector.load %arg4[%c0_8, %c0_9] : memref<8x128xf32, #tpu.memory_space<vmem>>, vector<8x128xf32>
    tpu.vector_store %arg4[%c0_8, %c0_9], %28 {strides = array<i32>} : memref<8x128xf32, #tpu.memory_space<vmem>>, vector<8x128xf32>,
    return
  }
  func.func @transform_0(%arg0: i32, %arg1: i32) -> (i32, i32) {
    %c0_i32 = arith.constant 0 : i32
    return %arg0, %arg1 : i32, i32
  }
  func.func @transform_1(%arg0: i32, %arg1: i32) -> (i32, i32) {
    %c0_i32 = arith.constant 0 : i32
    %c0_i32_0 = arith.constant 0 : i32
    return %arg0, %c0_i32 : i32, i32
  }
  func.func @transform_2(%arg0: i32, %arg1: i32) -> (i32, i32) {
    %c0_i32 = arith.constant 0 : i32
    return %arg0, %arg1 : i32, i32
  }
}

</mosaic_0001>

<llo_original>
// kernel: tpu_custom_call.1
$region0: #{tpu_custom_call.1}
  #allocation0 [shape = 'u32[]', space=smem, size = 0x4, offset = 0x4, fixed_abs, tag = 'smem constant byte address 0x4 - core index']
  #allocation1 [shape = 'u32[144,128]{1,0:T(1,128)}', space=vmem, size = 0x12000, scoped, tag = 'internal scratch']
  %s0 = inlined_call_operand.hbm [shape: f32[16,256], index: 0, kind: input, shape index: {}]
  %s1 = inlined_call_operand.vmem [shape: f32[16,1], index: 1, kind: input, shape index: {}]
  %s2 = inlined_call_operand.hbm [shape: f32[16,256], index: 2, kind: output, shape index: {}]
  %s3 = sld [smem:[#allocation0]]
  $region45: #{tpu_custom_call.1} parent=0
    _
  %s5 = ssub.s32 1, %s3
  %s6 = scalar_select 0, %s5, %s3
  $region1: #{tpu_custom_call.1} parent=0
    #allocation2 [shape = 'u8[8192]{0}', space=vmem, size = 0x2000, scoped, tag = 'input window, operand 0']
    #allocation3 [shape = 's32[2]{0}', space=sflag, size = 0x8, scoped, tag = 'scoped memory for tpu_custom_call.1']
    #allocation4 [shape = 's32[2]{0}', space=sflag, size = 0x8, scoped, tag = 'scoped memory for tpu_custom_call.1']
    #allocation5 [shape = 'u8[8192]{0}', space=vmem, size = 0x2000, scoped, tag = 'output window, operand 0']
    %7 = vsyncpa [#allocation3], 0
    %s8 = scalar_lea.sflag [#allocation3], 1
    %9 = vsyncpa %s8, 0
    %10 = vsyncpa [#allocation4], 0
    %s11 = scalar_lea.sflag [#allocation4], 1
    %12 = vsyncpa %s11, 0
    loop: start=0, step=1, limit=6
    $region2: #{tpu_custom_call.1} parent=1 // loop_pre_header
      _
    $region3: #{tpu_custom_call.1} parent=1 // loop_header
      %s14 = sphi 0, %s18
      %p15 = scmp.ge.s32.totalorder %s14, 6
      %s21 = sphi 0, %s33
      %s22 = sphi 0, %s29
      %s23 = sphi 0, %s21
      %s24 = sphi 0, %s22
      %s25 = sphi 0, %s23
      %s26 = sphi 0, %s24
      %s38 = sphi 0, %s40
      %s41 = sphi 0, %s38
      %s42 = sphi 0, %s41
      %s58 = sphi 0, %s42
      %s64 = sphi 0, %s66
      %s67 = sphi 0, %s64
      %s68 = sphi 0, %s67
      %s84 = sphi 0, %s68
      %s92 = sphi 0, %s94
      %s95 = sphi 0, %s92
      %s96 = sphi 0, %s95
      %s112 = sphi 0, %s96
    $region4: #{tpu_custom_call.1} parent=1 // loop_header_branch
      %17 = sbr.rel (%p15) target = $region8
    $region5: #{tpu_custom_call.1} parent=1 // loop_body
      %s19 = ssub.s32 %s14, 1
      %s20 = ssub.s32 %s14, 2
      %s27 = sadd.s32 1, %s22
      %p28 = scmp.ge.s32.totalorder %s27, 2
      %s29 = scalar_select %p28, 0, %s27
      %s30 = sadd.s32 1, %s21
      %s31 = scalar_select %p28, %s30, %s21
      %p32 = scmp.ge.s32.totalorder %s31, 2
      %s33 = scalar_select %p32, 0, %s31
      %s34 = ssub.s32 %s21, %s33
      %s35 = ssub.s32 %s22, %s29
      %s36 = sor.u32 %s34, %s35
      %p37 = scmp.eq.s32.totalorder %s36, 0
      %s39 = sadd.s32 %s38, 1
      %s40 = scalar_select %p37, %s38, %s39
      %p43 = pneg %p37
      %p44 = scmp.eq.s32.totalorder %s14, 3
      %p45 = por %p43, %p44
      %p46 = scmp.ne.s32.totalorder %s38, %s41
      %p47 = scmp.eq.s32.totalorder %s14, 0
      %p48 = por %p46, %p47
      %p49 = scmp.ne.s32.totalorder %s38, %s41
      %p50 = scmp.eq.s32.totalorder %s19, 3
      %p51 = por %p49, %p50
      %p52 = scmp.ne.s32.totalorder %s41, %s42
      %p53 = scmp.eq.s32.totalorder %s19, 0
      %p54 = por %p52, %p53
      %p55 = scmp.ne.s32.totalorder %s41, %s42
      %p56 = scmp.eq.s32.totalorder %s20, 3
      %p57 = por %p55, %p56
      %p59 = scmp.ne.s32.totalorder %s42, %s58
      %p60 = scmp.eq.s32.totalorder %s20, 0
      %p61 = por %p59, %p60
      %s62 = ssub.s32 %s21, %s33
      %p63 = scmp.eq.s32.totalorder %s62, 0
      %s65 = sadd.s32 %s64, 1
      %s66 = scalar_select %p63, %s64, %s65
      %p69 = pneg %p63
      %p70 = scmp.eq.s32.totalorder %s14, 3
      %p71 = por %p69, %p70
      %p72 = scmp.ne.s32.totalorder %s64, %s67
      %p73 = scmp.eq.s32.totalorder %s14, 0
      %p74 = por %p72, %p73
      %p75 = scmp.ne.s32.totalorder %s64, %s67
      %p76 = scmp.eq.s32.totalorder %s19, 3
      %p77 = por %p75, %p76
      %p78 = scmp.ne.s32.totalorder %s67, %s68
      %p79 = scmp.eq.s32.totalorder %s19, 0
      %p80 = por %p78, %p79
      %p81 = scmp.ne.s32.totalorder %s67, %s68
      %p82 = scmp.eq.s32.totalorder %s20, 3
      %p83 = por %p81, %p82
      %p85 = scmp.ne.s32.totalorder %s68, %s84
      %p86 = scmp.eq.s32.totalorder %s20, 0
      %p87 = por %p85, %p86
      %s88 = ssub.s32 %s21, %s33
      %s89 = ssub.s32 %s22, %s29
      %s90 = sor.u32 %s88, %s89
      %p91 = scmp.eq.s32.totalorder %s90, 0
      %s93 = sadd.s32 %s92, 1
      %s94 = scalar_select %p91, %s92, %s93
      %p97 = pneg %p91
      %p98 = scmp.eq.s32.totalorder %s14, 3
      %p99 = por %p97, %p98
      %p100 = scmp.ne.s32.totalorder %s92, %s95
      %p101 = scmp.eq.s32.totalorder %s14, 0
      %p102 = por %p100, %p101
      %p103 = scmp.ne.s32.totalorder %s92, %s95
      %p104 = scmp.eq.s32.totalorder %s19, 3
      %p105 = por %p103, %p104
      %p106 = scmp.ne.s32.totalorder %s95, %s96
      %p107 = scmp.eq.s32.totalorder %s19, 0
      %p108 = por %p106, %p107
      %p109 = scmp.ne.s32.totalorder %s95, %s96
      %p110 = scmp.eq.s32.totalorder %s20, 3
      %p111 = por %p109, %p110
      %p113 = scmp.ne.s32.totalorder %s96, %s112
      %p114 = scmp.eq.s32.totalorder %s20, 0
      %p115 = por %p113, %p114
      %p116 = scmp.le.s32.totalorder 1, %s14
      %p117 = scmp.lt.s32.totalorder %s14, 5
      %p118 = pnand %p116, %p117
      %p119 = pneg %p118
      // Predicated region
      $region9: #{tpu_custom_call.1} parent=5 // pred_check
        _
      $region10: #{tpu_custom_call.1} parent=5 // pred_check_branch
        %121 = sbr.rel (%p118) target = $region12
      $region11: #{tpu_custom_call.1} parent=5 // pred_region
        %s122 = ssub.s32 %s14, 1
      $region12: #{tpu_custom_call.1} parent=5 // pred_fallthru
        _
      %p123 = scmp.lt.s32.totalorder %s14, 4
      // Predicated region
      $region13: #{tpu_custom_call.1} parent=5 // pred_check
        %p124 = pneg %p123
      $region14: #{tpu_custom_call.1} parent=5 // pred_check_branch
        %126 = sbr.rel (%p124) target = $region16
      $region15: #{tpu_custom_call.1} parent=5 // pred_region
        // Predicated region
        $region17: #{tpu_custom_call.1} parent=15 // pred_check
          %p127 = pneg %p48
        $region18: #{tpu_custom_call.1} parent=15 // pred_check_branch
          %129 = sbr.rel (%p127) target = $region20
        $region19: #{tpu_custom_call.1} parent=15 // pred_region
          %s130 = sand.u32 %s38, 1
          %s131 = scalar_lea.sflag [#allocation3], %s130
          %s132 = sand.u32 %s38, 1
          %s133 = smul.addr %s132, 8
          %s134 = scalar_lea.vmem [#allocation2], %s133
          %s136 = ssub.s32 128, 128
          %137 = vsyncadd %s131, %s136
          %s138 = smul.addr %s21, 2
          %s139 = sadd.s32 %s22, %s138
          %s140 = smul.addr %s139, 128
          %s141 = scalar_lea.hbm %s0, %s140
          %s143 = sshll.u32 %s134, 4
          %s144 = int_to_ptr.vmem [resolvable:$true] %s143
          %146 = dma.hbm_to_vmem [thread:$0]  %s141, 128, %s144, %s131
        $region20: #{tpu_custom_call.1} parent=15 // pred_fallthru
          _
        // Predicated region
        $region21: #{tpu_custom_call.1} parent=15 // pred_check
          %p147 = pneg %p74
        $region22: #{tpu_custom_call.1} parent=15 // pred_check_branch
          %149 = sbr.rel (%p147) target = $region24
        $region23: #{tpu_custom_call.1} parent=15 // pred_region
          %p150 = scmp.lt.s32.totalorder %s21, 1
          %s151 = scalar_select %p150, %s21, 1
          %s152 = smul.addr %s151, 8
          %s153 = scalar_lea.vmem %s1, %s152
        $region24: #{tpu_custom_call.1} parent=15 // pred_fallthru
          _
      $region16: #{tpu_custom_call.1} parent=5 // pred_fallthru
        _
      %p154 = scmp.le.s32.totalorder 1, %s14
      %p155 = scmp.lt.s32.totalorder %s14, 5
      %p156 = pnand %p154, %p155
      %p157 = pneg %p156
      // Predicated region
      $region25: #{tpu_custom_call.1} parent=5 // pred_check
        _
      $region26: #{tpu_custom_call.1} parent=5 // pred_check_branch
        %159 = sbr.rel (%p156) target = $region28
      $region27: #{tpu_custom_call.1} parent=5 // pred_region
        %s160 = ssub.s32 %s14, 1
        %s161 = sand.u32 %s41, 1
        %s162 = scalar_lea.sflag [#allocation3], %s161
        %s163 = sand.u32 %s41, 1
        %s164 = smul.addr %s163, 8
        %s165 = scalar_lea.vmem [#allocation2], %s164
        // Predicated region
        $region29: #{tpu_custom_call.1} parent=27 // pred_check
          %p166 = pneg %p54
        $region30: #{tpu_custom_call.1} parent=27 // pred_check_branch
          %168 = sbr.rel (%p166) target = $region32
        $region31: #{tpu_custom_call.1} parent=27 // pred_region
          %169 = dma.done %s162, 128
        $region32: #{tpu_custom_call.1} parent=27 // pred_fallthru
          _
        %s170 = sand.u32 %s41, 1
        %s171 = scalar_lea.sflag [#allocation3], %s170
        %s172 = sand.u32 %s41, 1
        %s173 = smul.addr %s172, 8
        %s174 = scalar_lea.vmem [#allocation2], %s173
        %p175 = pneg %p54
        %p176 = pneg %p51
        %p177 = scmp.lt.s32.totalorder %s23, 1
        %s178 = scalar_select %p177, %s23, 1
        %s179 = smul.addr %s178, 8
        %s180 = scalar_lea.vmem %s1, %s179
        %p181 = pneg %p80
        %p182 = pneg %p77
        %p183 = pneg %p108
        %p184 = pneg %p105
        %s185 = sand.u32 %s95, 1
        %s186 = scalar_lea.sflag [#allocation4], %s185
        %s187 = sand.u32 %s95, 1
        %s188 = smul.addr %s187, 8
        %s189 = scalar_lea.vmem [#allocation5], %s188
        %p190 = scmp.lt.s32.totalorder %s23, 1
        %s191 = scalar_select %p190, %s23, 1
        %s192 = smul.addr %s191, 8
        %s193 = scalar_lea.vmem %s1, %s192
        %v194 = vld [vmem:[%s165] sm:$0xff]
        %v195 = vld [vmem:[%s193] sm:$0xff]
        %v196 = vmul.f32 %v194, %v194
        %197 = vrot.lane.b32.xlu0 %v196, 1
        %v198 = vpop.permute.xlu0 %197
        %199 = vrot.lane.b32.xlu0 %v196, 127
        %v200 = vpop.permute.xlu0 %199
        %v201 = vlaneseq
        %v202 = vand.u32 %v201, 127
        %v203 = vand.u32 %v202, 1
        %vm204 = vcmp.eq.s32.totalorder %v203, 0
        %v205 = vsel %vm204, %v200, %v198
        %v206 = vadd.f32 %v196, %v205
        %vm207 = vcmp.gt.f32.partialorder %v206, 0.0
        %v208 = vsel %vm207, %v206, 1.0
        %v209 = vrsqrt.pop %v208
        %v210 = vsel %vm207, %v206, 0.0
        %v211 = vmul.f32 %v210, %v209
        %213 = vset.pattern.permute.xlu0 0
        %214 = vperm.xlu0 %213, %v195
        %v215 = vpop.permute.xlu0 %214
        %v217 = vadd.f32 %v211, %v215
        %v218 = vmax.f32 %v217, 0.0
        %v219 = vmul.f32 %v218, %v209
        %v220 = vmul.f32 %v194, %v219
        %v221 = vsel %vm204, %v218, 0.0
        %v222 = vsel %vm207, %v220, %v221
        %223 = vst [vmem:[%s189] sm:$0xff] %v222
        %s224 = sand.u32 %s95, 1
        %s225 = scalar_lea.sflag [#allocation4], %s224
        %s226 = sand.u32 %s95, 1
        %s227 = smul.addr %s226, 8
        %s228 = scalar_lea.vmem [#allocation5], %s227
        // Predicated region
        $region33: #{tpu_custom_call.1} parent=27 // pred_check
          %p229 = pneg %p105
        $region34: #{tpu_custom_call.1} parent=27 // pred_check_branch
          %231 = sbr.rel (%p229) target = $region36
        $region35: #{tpu_custom_call.1} parent=27 // pred_region
          %s233 = ssub.s32 128, 128
          %234 = vsyncadd %s225, %s233
          %s235 = smul.addr %s23, 2
          %s236 = sadd.s32 %s24, %s235
          %s237 = smul.addr %s236, 128
          %s238 = scalar_lea.hbm %s2, %s237
          %s240 = sshll.u32 %s228, 4
          %s241 = int_to_ptr.vmem [resolvable:$true] %s240
          %243 = dma.vmem_to_hbm [thread:$0]  %s241, 128, %s238, %s225
        $region36: #{tpu_custom_call.1} parent=27 // pred_fallthru
          _
      $region28: #{tpu_custom_call.1} parent=5 // pred_fallthru
        _
      %p244 = scmp.le.s32.totalorder 2, %s14
      // Predicated region
      $region37: #{tpu_custom_call.1} parent=5 // pred_check
        %p245 = pneg %p244
      $region38: #{tpu_custom_call.1} parent=5 // pred_check_branch
        %247 = sbr.rel (%p245) target = $region40
      $region39: #{tpu_custom_call.1} parent=5 // pred_region
        %s248 = ssub.s32 %s14, 2
        // Predicated region
        $region41: #{tpu_custom_call.1} parent=39 // pred_check
          %p249 = pneg %p111
        $region42: #{tpu_custom_call.1} parent=39 // pred_check_branch
          %251 = sbr.rel (%p249) target = $region44
        $region43: #{tpu_custom_call.1} parent=39 // pred_region
          %s252 = sand.u32 %s96, 1
          %s253 = scalar_lea.sflag [#allocation4], %s252
          %s254 = sand.u32 %s96, 1
          %s255 = smul.addr %s254, 8
          %s256 = scalar_lea.vmem [#allocation5], %s255
          %257 = dma.done %s253, 128
        $region44: #{tpu_custom_call.1} parent=39 // pred_fallthru
          _
      $region40: #{tpu_custom_call.1} parent=5 // pred_fallthru
        _
    $region6: #{tpu_custom_call.1} parent=1 // loop_footer
      %s18 = sadd.s32 1, %s14
    $region7: #{tpu_custom_call.1} parent=1 // loop_footer_branch
      %13 = sbr.rel target = $region3
    $region8: #{tpu_custom_call.1} parent=1 // loop_exit
      _
    %258 = vsyncpa [#allocation3], 1
    %s259 = scalar_lea.sflag [#allocation3], 1
    %260 = vsyncpa %s259, 1
    %261 = vsyncpa [#allocation4], 1
    %s262 = scalar_lea.sflag [#allocation4], 1
    %263 = vsyncpa %s262, 1

</llo_original>
